<compile_context>
chip_gen: v5e
topology: v5e:2x2
jax: 0.10.0
libtpu: 0.0.40
codegen_flags: <defaults>
</compile_context>

<pallas_src>
import functools

import jax
import jax.numpy as jnp
from jax.experimental import pallas as pl
from jax.experimental.pallas import tpu as pltpu

LANE = 128  # TPU lane width; output-slab width and hidden-dim padding target


def _elu(x):
    # ELU with alpha=1.0 (PyTorch default). Clamp the exp argument so the
    # discarded branch never overflows.
    return jnp.where(x > 0, x, jnp.exp(jnp.minimum(x, 0.0)) - 1.0)


def mlp_kernel(x_ref, w1_ref, b1_ref, w2_ref, b2_ref, w3_ref, b3_ref, o_ref):
    # x_ref: (TB, D_in)  w1: (D_in, HP)  b1/b2/w3: (1, HP)  w2: (HP, HP)
    # b3: (1, 1) in SMEM  o_ref: (TB, LANE)
    x = x_ref[...].astype(w1_ref.dtype)

    # fc1 + ELU  (MXU matmul, f32 accumulate; bias add + ELU on VPU/EUP)
    h1 = jnp.dot(x, w1_ref[...], preferred_element_type=jnp.float32) + b1_ref[...]
    h1 = _elu(h1)                                                    # (TB, HP) f32

    # fc2 + ELU
    h2 = jnp.dot(h1.astype(w2_ref.dtype), w2_ref[...],
                 preferred_element_type=jnp.float32) + b2_ref[...]
    h2 = _elu(h2)                                                    # (TB, HP) f32

    # fc3: H -> 1 as VPU multiply + lane reduction (avoids an N=1 MXU matmul).
    out = jnp.sum(h2 * w3_ref[...].astype(jnp.float32), axis=-1, keepdims=True)
    out = out + b3_ref[0, 0]                                         # (TB, 1)

    # Lane-dense store: replicate the scalar column across 128 lanes; the
    # wrapper slices [:, :1]. Avoids masked width-1 stores.
    o_ref[...] = jnp.broadcast_to(out, o_ref.shape).astype(o_ref.dtype)


def _round_up(v, m):
    return (v + m - 1) // m * m


def pad_params(w1, b1, w2, b2, w3, b3, *, param_dtype=jnp.float32):
    """Zero-pad the hidden dim to a multiple of 128 and lay fc3 out as a (1, HP) row.

    Padding is exact: padded hidden units see zero weights and zero biases, so
    elu(0) = 0 and they contribute nothing downstream.
    Use param_dtype=jnp.bfloat16 on v6e/v7x for MXU-native weights.
    """
    d_in, h = w1.shape
    hp = max(LANE, _round_up(h, LANE))

    w1p = jnp.zeros((d_in, hp), param_dtype).at[:, :h].set(w1.astype(param_dtype))
    b1p = jnp.zeros((1, hp), jnp.float32).at[:, :h].set(b1.astype(jnp.float32))
    w2p = jnp.zeros((hp, hp), param_dtype).at[:h, :h].set(w2.astype(param_dtype))
    b2p = jnp.zeros((1, hp), jnp.float32).at[:, :h].set(b2.astype(jnp.float32))
    w3p = jnp.zeros((1, hp), jnp.float32).at[:, :h].set(w3.reshape(1, h).astype(jnp.float32))
    b3p = b3.reshape(1, 1).astype(jnp.float32)
    return w1p, b1p, w2p, b2p, w3p, b3p


@functools.partial(jax.jit, static_argnames=("block_b",))
def mlp_forward(x, w1p, b1p, w2p, b2p, w3p, b3p, *, block_b=128):
    """x: (B, D_in) f32; padded params from pad_params(). Returns (B, 1) f32."""
    B, D_in = x.shape
    HP = w1p.shape[1]

    # Pad the batch so the grid tiles it exactly (padded rows are discarded).
    Bp = max(block_b, _round_up(B, block_b))
    if Bp != B:
        x = jnp.zeros((Bp, D_in), x.dtype).at[:B, :].set(x)

    grid = (Bp // block_b,)
    full = lambda i: (0, 0)

    itemsize = jnp.dtype(w1p.dtype).itemsize
    cost = pl.CostEstimate(
        flops=2 * Bp * (D_in * HP + HP * HP + HP),
        transcendentals=2 * Bp * HP,                        # the two ELU exp's
        bytes_accessed=(4 * Bp * D_in                       # x
                        + itemsize * (D_in * HP + HP * HP)  # w1, w2
                        + 4 * (3 * HP + 1)                  # b1, b2, w3, b3
                        + 4 * Bp * LANE),                   # lane-padded output slab
    )

    out_padded = pl.pallas_call(
        mlp_kernel,
        out_shape=jax.ShapeDtypeStruct((Bp, LANE), jnp.float32),
        grid_spec=pltpu.PrefetchScalarGridSpec(
            num_scalar_prefetch=0,
            grid=grid,
            in_specs=[
                pl.BlockSpec((block_b, D_in), lambda i: (i, 0)),   # x tiled on batch
                pl.BlockSpec((D_in, HP), full),                    # w1 resident in VMEM
                pl.BlockSpec((1, HP), full),                       # b1
                pl.BlockSpec((HP, HP), full),                      # w2 resident in VMEM
                pl.BlockSpec((1, HP), full),                       # b2
                pl.BlockSpec((1, HP), full),                       # w3 as a lane row
                pl.BlockSpec(memory_space=pltpu.SMEM),             # b3 scalar in SMEM
            ],
            out_specs=pl.BlockSpec((block_b, LANE), lambda i: (i, 0)),
        ),
        compiler_params=pltpu.CompilerParams(
            dimension_semantics=("parallel",),
        ),
        cost_estimate=cost,
    )(x, w1p, b1p, w2p, b2p, w3p, b3p)

    return out_padded[:B, :1]


def init_params(key, input_size, hidden_size):
    """Mimics nn.Linear's uniform(-1/sqrt(fan_in), +) init; weights stored as [in, out]."""
    ks = jax.random.split(key, 6)

    def linear(kw, kb, fan_in, fan_out):
        bound = 1.0 / jnp.sqrt(fan_in)
        w = jax.random.uniform(kw, (fan_in, fan_out), jnp.float32, -bound, bound)
        b = jax.random.uniform(kb, (1, fan_out), jnp.float32, -bound, bound)
        return w, b

    w1, b1 = linear(ks[0], ks[1], input_size, hidden_size)
    w2, b2 = linear(ks[2], ks[3], hidden_size, hidden_size)
    w3, b3 = linear(ks[4], ks[5], hidden_size, 1)
    return w1, b1, w2, b2, w3, b3


def mlp_reference(x, w1, b1, w2, b2, w3, b3):
    h = jax.nn.elu(x @ w1 + b1)
    h = jax.nn.elu(h @ w2 + b2)
    return h @ w3 + b3


if __name__ == "__main__":
    input_size, hidden_size, batch = 16, 32, 256   # batch=256 -> 2 parallel grid steps

    key = jax.random.PRNGKey(0)
    kx, kp = jax.random.split(key)
    x = jax.random.normal(kx, (batch, input_size), jnp.float32)
    w1, b1, w2, b2, w3, b3 = init_params(kp, input_size, hidden_size)

    # f32 params for the exact check; pass param_dtype=jnp.bfloat16 on v6e/v7x.
    padded = pad_params(w1, b1, w2, b2, w3, b3, param_dtype=jnp.float32)

    out = mlp_forward(x, *padded, block_b=128)
    out = jax.block_until_ready(out)

    ref = mlp_reference(x, w1, b1, w2, b2, w3, b3)
    assert out.shape == (batch, 1), out.shape
    assert jnp.allclose(out, ref, atol=1e-5, rtol=1e-5), "mismatch vs reference"

    print("KERNEL_OK")
</pallas_src>

<mosaic_0001>
module attributes {stable_mosaic.version = 11 : i64} {
  func.func @mlp_kernel(%arg0: i32, %arg1: memref<128x16xf32, #tpu.memory_space<vmem>>, %arg2: memref<16x128xf32, #tpu.memory_space<vmem>>, %arg3: memref<1x128xf32, #tpu.memory_space<vmem>>, %arg4: memref<128x128xf32, #tpu.memory_space<vmem>>, %arg5: memref<1x128xf32, #tpu.memory_space<vmem>>, %arg6: memref<1x128xf32, #tpu.memory_space<vmem>>, %arg7: memref<1x1xf32, #tpu.memory_space<smem>>, %arg8: memref<128x128xf32, #tpu.memory_space<vmem>>) attributes {dimension_semantics = [#tpu.dimension_semantics<parallel>], iteration_bounds = array<i64: 2>, scalar_prefetch = 0 : i64, scratch_operands = 0 : i64, tpu.core_type = #tpu.core_type<tc>, window_params = [{transform_indices = @transform_0, window_bounds = array<i64: 128, 16>}, {pipeline_mode = #tpu.pipeline_mode<synchronous>, transform_indices = @transform_1, window_bounds = array<i64: 16, 128>}, {pipeline_mode = #tpu.pipeline_mode<synchronous>, transform_indices = @transform_2, window_bounds = array<i64: 1, 128>}, {pipeline_mode = #tpu.pipeline_mode<synchronous>, transform_indices = @transform_3, window_bounds = array<i64: 128, 128>}, {pipeline_mode = #tpu.pipeline_mode<synchronous>, transform_indices = @transform_4, window_bounds = array<i64: 1, 128>}, {pipeline_mode = #tpu.pipeline_mode<synchronous>, transform_indices = @transform_5, window_bounds = array<i64: 1, 128>}, {transform_indices = @transform_6, window_bounds = array<i64: 1, 1>}, {transform_indices = @transform_7, window_bounds = array<i64: 128, 128>}]} {
    %c0 = arith.constant 0 : index
    %c0_0 = arith.constant 0 : index
    %0 = vector.load %arg1[%c0, %c0_0] : memref<128x16xf32, #tpu.memory_space<vmem>>, vector<128x16xf32>
    %c0_1 = arith.constant 0 : index
    %c0_2 = arith.constant 0 : index
    %1 = vector.load %arg2[%c0_1, %c0_2] : memref<16x128xf32, #tpu.memory_space<vmem>>, vector<16x128xf32>
    %cst = arith.constant dense<0.000000e+00> : vector<128x128xf32>
    %2 = tpu.matmul %0, %1, %cst {dimension_numbers = #tpu.dot_dimension_numbers<[1], [0], [0], [1], [0, 0, 1, 1], [], []>} : vector<128x16xf32>, vector<16x128xf32>, vector<128x128xf32> -> vector<128x128xf32>
    %c0_3 = arith.constant 0 : index
    %c0_4 = arith.constant 0 : index
    %3 = vector.load %arg3[%c0_3, %c0_4] : memref<1x128xf32, #tpu.memory_space<vmem>>, vector<1x128xf32>
    %4 = vector.broadcast %3 : vector<1x128xf32> to vector<128x128xf32>
    %5 = arith.addf %2, %4 : vector<128x128xf32>
    %cst_5 = arith.constant 0.000000e+00 : f32
    %6 = vector.broadcast %cst_5 : f32 to vector<128x128xf32>
    %7 = arith.cmpf ogt, %5, %6 : vector<128x128xf32>
    %cst_6 = arith.constant 0.000000e+00 : f32
    %8 = vector.broadcast %cst_6 : f32 to vector<128x128xf32>
    %9 = arith.minimumf %5, %8 : vector<128x128xf32>
    %10 = math.exp %9 : vector<128x128xf32>
    %cst_7 = arith.constant 1.000000e+00 : f32
    %11 = vector.broadcast %cst_7 : f32 to vector<128x128xf32>
    %12 = arith.subf %10, %11 : vector<128x128xf32>
    %13 = arith.select %7, %5, %12 : vector<128x128xi1>, vector<128x128xf32>
    %c0_8 = arith.constant 0 : index
    %c0_9 = arith.constant 0 : index
    %14 = vector.load %arg4[%c0_8, %c0_9] : memref<128x128xf32, #tpu.memory_space<vmem>>, vector<128x128xf32>
    %cst_10 = arith.constant dense<0.000000e+00> : vector<128x128xf32>
    %15 = tpu.matmul %13, %14, %cst_10 {dimension_numbers = #tpu.dot_dimension_numbers<[1], [0], [0], [1], [0, 0, 1, 1], [], []>} : vector<128x128xf32>, vector<128x128xf32>, vector<128x128xf32> -> vector<128x128xf32>
    %c0_11 = arith.constant 0 : index
    %c0_12 = arith.constant 0 : index
    %16 = vector.load %arg5[%c0_11, %c0_12] : memref<1x128xf32, #tpu.memory_space<vmem>>, vector<1x128xf32>
    %17 = vector.broadcast %16 : vector<1x128xf32> to vector<128x128xf32>
    %18 = arith.addf %15, %17 : vector<128x128xf32>
    %cst_13 = arith.constant 0.000000e+00 : f32
    %19 = vector.broadcast %cst_13 : f32 to vector<128x128xf32>
    %20 = arith.cmpf ogt, %18, %19 : vector<128x128xf32>
    %cst_14 = arith.constant 0.000000e+00 : f32
    %21 = vector.broadcast %cst_14 : f32 to vector<128x128xf32>
    %22 = arith.minimumf %18, %21 : vector<128x128xf32>
    %23 = math.exp %22 : vector<128x128xf32>
    %cst_15 = arith.constant 1.000000e+00 : f32
    %24 = vector.broadcast %cst_15 : f32 to vector<128x128xf32>
    %25 = arith.subf %23, %24 : vector<128x128xf32>
    %26 = arith.select %20, %18, %25 : vector<128x128xi1>, vector<128x128xf32>
    %c0_16 = arith.constant 0 : index
    %c0_17 = arith.constant 0 : index
    %27 = vector.load %arg6[%c0_16, %c0_17] : memref<1x128xf32, #tpu.memory_space<vmem>>, vector<1x128xf32>
    %28 = vector.broadcast %27 : vector<1x128xf32> to vector<128x128xf32>
    %29 = arith.mulf %26, %28 : vector<128x128xf32>
    %cst_18 = arith.constant dense<0.000000e+00> : vector<128xf32>
    %30 = vector.multi_reduction <add>, %29, %cst_18 [1] : vector<128x128xf32> to vector<128xf32>
    %31 = vector.shape_cast %30 : vector<128xf32> to vector<128x1xf32>
    %c0_19 = arith.constant 0 : index
    %c0_20 = arith.constant 0 : index
    %32 = memref.load %arg7[%c0_19, %c0_20] : memref<1x1xf32, #tpu.memory_space<smem>>
    %33 = vector.broadcast %32 : f32 to vector<128x1xf32>
    %34 = arith.addf %31, %33 : vector<128x1xf32>
    %35 = vector.shape_cast %34 : vector<128x1xf32> to vector<128x1xf32>
    %36 = vector.broadcast %35 : vector<128x1xf32> to vector<128x128xf32>
    %c0_21 = arith.constant 0 : index
    %c0_22 = arith.constant 0 : index
    %37 = vector.load %arg8[%c0_21, %c0_22] : memref<128x128xf32, #tpu.memory_space<vmem>>, vector<128x128xf32>
    tpu.vector_store %arg8[%c0_21, %c0_22], %36 {strides = array<i32>} : memref<128x128xf32, #tpu.memory_space<vmem>>, vector<128x128xf32>,
    return
  }
  func.func @transform_0(%arg0: i32) -> (i32, i32) {
    %c0_i32 = arith.constant 0 : i32
    %c0_i32_0 = arith.constant 0 : i32
    return %arg0, %c0_i32 : i32, i32
  }
  func.func @transform_1(%arg0: i32) -> (i32, i32) {
    %c0_i32 = arith.constant 0 : i32
    %c0_i32_0 = arith.constant 0 : i32
    %c0_i32_1 = arith.constant 0 : i32
    return %c0_i32, %c0_i32_0 : i32, i32
  }
  func.func @transform_2(%arg0: i32) -> (i32, i32) {
    %c0_i32 = arith.constant 0 : i32
    %c0_i32_0 = arith.constant 0 : i32
    %c0_i32_1 = arith.constant 0 : i32
    return %c0_i32, %c0_i32_0 : i32, i32
  }
  func.func @transform_3(%arg0: i32) -> (i32, i32) {
    %c0_i32 = arith.constant 0 : i32
    %c0_i32_0 = arith.constant 0 : i32
    %c0_i32_1 = arith.constant 0 : i32
    return %c0_i32, %c0_i32_0 : i32, i32
  }
  func.func @transform_4(%arg0: i32) -> (i32, i32) {
    %c0_i32 = arith.constant 0 : i32
    %c0_i32_0 = arith.constant 0 : i32
    %c0_i32_1 = arith.constant 0 : i32
    return %c0_i32, %c0_i32_0 : i32, i32
  }
  func.func @transform_5(%arg0: i32) -> (i32, i32) {
    %c0_i32 = arith.constant 0 : i32
    %c0_i32_0 = arith.constant 0 : i32
    %c0_i32_1 = arith.constant 0 : i32
    return %c0_i32, %c0_i32_0 : i32, i32
  }
  func.func @transform_6(%arg0: i32) -> (i32, i32) {
    %c0_i32 = arith.constant 0 : i32
    %c0_i32_0 = arith.constant 0 : i32
    %c0_i32_1 = arith.constant 0 : i32
    return %c0_i32, %c0_i32_0 : i32, i32
  }
  func.func @transform_7(%arg0: i32) -> (i32, i32) {
    %c0_i32 = arith.constant 0 : i32
    %c0_i32_0 = arith.constant 0 : i32
    return %arg0, %c0_i32 : i32, i32
  }
}

</mosaic_0001>

<llo_original>
// kernel: mlp_forward.1
$region0: #{mlp_forward.1}
  #allocation0 [shape = 'u32[]', space=smem, size = 0x4, offset = 0x4, fixed_abs, tag = 'smem constant byte address 0x4 - core index']
  #allocation1 [shape = 'u32[72,128]{1,0:T(1,128)}', space=vmem, size = 0x9000, scoped, tag = 'internal scratch']
  #allocation2 [shape = 'f32[1,1]{1,0:T(1,128)S(6)}', space=smem, size = 0x200, scoped, tag = 'scoped memory for mlp_forward.1']
  %s0 = inlined_call_operand.vmem [shape: f32[256,16], index: 0, kind: input, shape index: {}]
  %s1 = inlined_call_operand.vmem [shape: f32[16,128], index: 1, kind: input, shape index: {}]
  %s2 = inlined_call_operand.vmem [shape: f32[1,128], index: 2, kind: input, shape index: {}]
  %s3 = inlined_call_operand.vmem [shape: f32[128,128], index: 3, kind: input, shape index: {}]
  %s4 = inlined_call_operand.vmem [shape: f32[1,128], index: 4, kind: input, shape index: {}]
  %s5 = inlined_call_operand.vmem [shape: f32[1,128], index: 5, kind: input, shape index: {}]
  %s6 = inlined_call_operand.<no memory space> [shape: f32[1,1], index: 6, kind: input, shape index: {}]
  %s7 = inlined_call_operand.vmem [shape: f32[256,128], index: 7, kind: output, shape index: {}]
  %s8 = sld [smem:[#allocation0]]
  $region61: #{mlp_forward.1} parent=0
    _
  %s10 = ssub.s32 1, %s8
  %s11 = scalar_select 0, %s10, %s8
  %12 = sst [smem:[#allocation2]] %s6
  loop: start=0, step=1, limit=4
  $region2: #{mlp_forward.1} parent=0 // loop_pre_header
    _
  $region3: #{mlp_forward.1} parent=0 // loop_header
    %s14 = sphi 0, %s18
    %p15 = scmp.ge.s32.totalorder %s14, 4
    %s24 = sphi 0, %s26
    %s27 = sphi 0, %s24
    %s28 = sphi 0, %s27
    %s44 = sphi 0, %s28
    %s48 = sphi 0, %s48
    %s50 = sphi 0, %s48
    %s51 = sphi 0, %s50
    %s65 = sphi 0, %s51
    %s69 = sphi 0, %s69
    %s71 = sphi 0, %s69
    %s72 = sphi 0, %s71
    %s86 = sphi 0, %s72
    %s90 = sphi 0, %s90
    %s92 = sphi 0, %s90
    %s93 = sphi 0, %s92
    %s107 = sphi 0, %s93
    %s111 = sphi 0, %s111
    %s113 = sphi 0, %s111
    %s114 = sphi 0, %s113
    %s128 = sphi 0, %s114
    %s132 = sphi 0, %s132
    %s134 = sphi 0, %s132
    %s135 = sphi 0, %s134
    %s149 = sphi 0, %s135
    %s153 = sphi 0, %s153
    %s155 = sphi 0, %s153
    %s156 = sphi 0, %s155
    %s170 = sphi 0, %s156
    %s176 = sphi 0, %s178
    %s179 = sphi 0, %s176
    %s180 = sphi 0, %s179
    %s196 = sphi 0, %s180
  $region4: #{mlp_forward.1} parent=0 // loop_header_branch
    %17 = sbr.rel (%p15) target = $region8
  $region5: #{mlp_forward.1} parent=0 // loop_body
    %s19 = ssub.s32 %s14, 1
    %s20 = ssub.s32 %s14, 2
    %s21 = sadd.s32 %s14, 1
    %s22 = ssub.s32 %s14, %s21
    %p23 = scmp.eq.s32.totalorder %s22, 0
    %s25 = sadd.s32 %s24, 1
    %s26 = scalar_select %p23, %s24, %s25
    %p29 = pneg %p23
    %p30 = scmp.eq.s32.totalorder %s14, 1
    %p31 = por %p29, %p30
    %p32 = scmp.ne.s32.totalorder %s24, %s27
    %p33 = scmp.eq.s32.totalorder %s14, 0
    %p34 = por %p32, %p33
    %p35 = scmp.ne.s32.totalorder %s24, %s27
    %p36 = scmp.eq.s32.totalorder %s19, 1
    %p37 = por %p35, %p36
    %p38 = scmp.ne.s32.totalorder %s27, %s28
    %p39 = scmp.eq.s32.totalorder %s19, 0
    %p40 = por %p38, %p39
    %p41 = scmp.ne.s32.totalorder %s27, %s28
    %p42 = scmp.eq.s32.totalorder %s20, 1
    %p43 = por %p41, %p42
    %p45 = scmp.ne.s32.totalorder %s28, %s44
    %p46 = scmp.eq.s32.totalorder %s20, 0
    %p47 = por %p45, %p46
    %s49 = sadd.s32 %s48, 1
    %p52 = scmp.eq.s32.totalorder %s14, 1
    %p53 = scmp.ne.s32.totalorder %s48, %s50
    %p54 = scmp.eq.s32.totalorder %s14, 0
    %p55 = por %p53, %p54
    %p56 = scmp.ne.s32.totalorder %s48, %s50
    %p57 = scmp.eq.s32.totalorder %s19, 1
    %p58 = por %p56, %p57
    %p59 = scmp.ne.s32.totalorder %s50, %s51
    %p60 = scmp.eq.s32.totalorder %s19, 0
    %p61 = por %p59, %p60
    %p62 = scmp.ne.s32.totalorder %s50, %s51
    %p63 = scmp.eq.s32.totalorder %s20, 1
    %p64 = por %p62, %p63
    %p66 = scmp.ne.s32.totalorder %s51, %s65
    %p67 = scmp.eq.s32.totalorder %s20, 0
    %p68 = por %p66, %p67
    %s70 = sadd.s32 %s69, 1
    %p73 = scmp.eq.s32.totalorder %s14, 1
    %p74 = scmp.ne.s32.totalorder %s69, %s71
    %p75 = scmp.eq.s32.totalorder %s14, 0
    %p76 = por %p74, %p75
    %p77 = scmp.ne.s32.totalorder %s69, %s71
    %p78 = scmp.eq.s32.totalorder %s19, 1
    %p79 = por %p77, %p78
    %p80 = scmp.ne.s32.totalorder %s71, %s72
    %p81 = scmp.eq.s32.totalorder %s19, 0
    %p82 = por %p80, %p81
    %p83 = scmp.ne.s32.totalorder %s71, %s72
    %p84 = scmp.eq.s32.totalorder %s20, 1
    %p85 = por %p83, %p84
    %p87 = scmp.ne.s32.totalorder %s72, %s86
    %p88 = scmp.eq.s32.totalorder %s20, 0
    %p89 = por %p87, %p88
    %s91 = sadd.s32 %s90, 1
    %p94 = scmp.eq.s32.totalorder %s14, 1
    %p95 = scmp.ne.s32.totalorder %s90, %s92
    %p96 = scmp.eq.s32.totalorder %s14, 0
    %p97 = por %p95, %p96
    %p98 = scmp.ne.s32.totalorder %s90, %s92
    %p99 = scmp.eq.s32.totalorder %s19, 1
    %p100 = por %p98, %p99
    %p101 = scmp.ne.s32.totalorder %s92, %s93
    %p102 = scmp.eq.s32.totalorder %s19, 0
    %p103 = por %p101, %p102
    %p104 = scmp.ne.s32.totalorder %s92, %s93
    %p105 = scmp.eq.s32.totalorder %s20, 1
    %p106 = por %p104, %p105
    %p108 = scmp.ne.s32.totalorder %s93, %s107
    %p109 = scmp.eq.s32.totalorder %s20, 0
    %p110 = por %p108, %p109
    %s112 = sadd.s32 %s111, 1
    %p115 = scmp.eq.s32.totalorder %s14, 1
    %p116 = scmp.ne.s32.totalorder %s111, %s113
    %p117 = scmp.eq.s32.totalorder %s14, 0
    %p118 = por %p116, %p117
    %p119 = scmp.ne.s32.totalorder %s111, %s113
    %p120 = scmp.eq.s32.totalorder %s19, 1
    %p121 = por %p119, %p120
    %p122 = scmp.ne.s32.totalorder %s113, %s114
    %p123 = scmp.eq.s32.totalorder %s19, 0
    %p124 = por %p122, %p123
    %p125 = scmp.ne.s32.totalorder %s113, %s114
    %p126 = scmp.eq.s32.totalorder %s20, 1
    %p127 = por %p125, %p126
    %p129 = scmp.ne.s32.totalorder %s114, %s128
    %p130 = scmp.eq.s32.totalorder %s20, 0
    %p131 = por %p129, %p130
    %s133 = sadd.s32 %s132, 1
    %p136 = scmp.eq.s32.totalorder %s14, 1
    %p137 = scmp.ne.s32.totalorder %s132, %s134
    %p138 = scmp.eq.s32.totalorder %s14, 0
    %p139 = por %p137, %p138
    %p140 = scmp.ne.s32.totalorder %s132, %s134
    %p141 = scmp.eq.s32.totalorder %s19, 1
    %p142 = por %p140, %p141
    %p143 = scmp.ne.s32.totalorder %s134, %s135
    %p144 = scmp.eq.s32.totalorder %s19, 0
    %p145 = por %p143, %p144
    %p146 = scmp.ne.s32.totalorder %s134, %s135
    %p147 = scmp.eq.s32.totalorder %s20, 1
    %p148 = por %p146, %p147
    %p150 = scmp.ne.s32.totalorder %s135, %s149
    %p151 = scmp.eq.s32.totalorder %s20, 0
    %p152 = por %p150, %p151
    %s154 = sadd.s32 %s153, 1
    %p157 = scmp.eq.s32.totalorder %s14, 1
    %p158 = scmp.ne.s32.totalorder %s153, %s155
    %p159 = scmp.eq.s32.totalorder %s14, 0
    %p160 = por %p158, %p159
    %p161 = scmp.ne.s32.totalorder %s153, %s155
    %p162 = scmp.eq.s32.totalorder %s19, 1
    %p163 = por %p161, %p162
    %p164 = scmp.ne.s32.totalorder %s155, %s156
    %p165 = scmp.eq.s32.totalorder %s19, 0
    %p166 = por %p164, %p165
    %p167 = scmp.ne.s32.totalorder %s155, %s156
    %p168 = scmp.eq.s32.totalorder %s20, 1
    %p169 = por %p167, %p168
    %p171 = scmp.ne.s32.totalorder %s156, %s170
    %p172 = scmp.eq.s32.totalorder %s20, 0
    %p173 = por %p171, %p172
    %s174 = ssub.s32 %s14, %s21
    %p175 = scmp.eq.s32.totalorder %s174, 0
    %s177 = sadd.s32 %s176, 1
    %s178 = scalar_select %p175, %s176, %s177
    %p181 = pneg %p175
    %p182 = scmp.eq.s32.totalorder %s14, 1
    %p183 = por %p181, %p182
    %p184 = scmp.ne.s32.totalorder %s176, %s179
    %p185 = scmp.eq.s32.totalorder %s14, 0
    %p186 = por %p184, %p185
    %p187 = scmp.ne.s32.totalorder %s176, %s179
    %p188 = scmp.eq.s32.totalorder %s19, 1
    %p189 = por %p187, %p188
    %p190 = scmp.ne.s32.totalorder %s179, %s180
    %p191 = scmp.eq.s32.totalorder %s19, 0
    %p192 = por %p190, %p191
    %p193 = scmp.ne.s32.totalorder %s179, %s180
    %p194 = scmp.eq.s32.totalorder %s20, 1
    %p195 = por %p193, %p194
    %p197 = scmp.ne.s32.totalorder %s180, %s196
    %p198 = scmp.eq.s32.totalorder %s20, 0
    %p199 = por %p197, %p198
    %p200 = scmp.le.s32.totalorder 1, %s14
    %p201 = scmp.lt.s32.totalorder %s14, 3
    %p202 = pnand %p200, %p201
    %p203 = pneg %p202
    // Predicated region
    $region9: #{mlp_forward.1} parent=5 // pred_check
      _
    $region10: #{mlp_forward.1} parent=5 // pred_check_branch
      %205 = sbr.rel (%p202) target = $region12
    $region11: #{mlp_forward.1} parent=5 // pred_region
      %s206 = ssub.s32 %s14, 1
      // Predicated region
      $region13: #{mlp_forward.1} parent=11 // pred_check
        %p207 = pneg %p61
      $region14: #{mlp_forward.1} parent=11 // pred_check_branch
        %209 = sbr.rel (%p207) target = $region16
      $region15: #{mlp_forward.1} parent=11 // pred_region
        _
      $region16: #{mlp_forward.1} parent=11 // pred_fallthru
        _
      // Predicated region
      $region17: #{mlp_forward.1} parent=11 // pred_check
        %p210 = pneg %p82
      $region18: #{mlp_forward.1} parent=11 // pred_check_branch
        %212 = sbr.rel (%p210) target = $region20
      $region19: #{mlp_forward.1} parent=11 // pred_region
        _
      $region20: #{mlp_forward.1} parent=11 // pred_fallthru
        _
      // Predicated region
      $region21: #{mlp_forward.1} parent=11 // pred_check
        %p213 = pneg %p103
      $region22: #{mlp_forward.1} parent=11 // pred_check_branch
        %215 = sbr.rel (%p213) target = $region24
      $region23: #{mlp_forward.1} parent=11 // pred_region
        _
      $region24: #{mlp_forward.1} parent=11 // pred_fallthru
        _
      // Predicated region
      $region25: #{mlp_forward.1} parent=11 // pred_check
        %p216 = pneg %p124
      $region26: #{mlp_forward.1} parent=11 // pred_check_branch
        %218 = sbr.rel (%p216) target = $region28
      $region27: #{mlp_forward.1} parent=11 // pred_region
        _
      $region28: #{mlp_forward.1} parent=11 // pred_fallthru
        _
      // Predicated region
      $region29: #{mlp_forward.1} parent=11 // pred_check
        %p219 = pneg %p145
      $region30: #{mlp_forward.1} parent=11 // pred_check_branch
        %221 = sbr.rel (%p219) target = $region32
      $region31: #{mlp_forward.1} parent=11 // pred_region
        _
      $region32: #{mlp_forward.1} parent=11 // pred_fallthru
        _
      // Predicated region
      $region33: #{mlp_forward.1} parent=11 // pred_check
        %p222 = pneg %p166
      $region34: #{mlp_forward.1} parent=11 // pred_check_branch
        %224 = sbr.rel (%p222) target = $region36
      $region35: #{mlp_forward.1} parent=11 // pred_region
        _
      $region36: #{mlp_forward.1} parent=11 // pred_fallthru
        _
    $region12: #{mlp_forward.1} parent=5 // pred_fallthru
      _
    %p225 = scmp.lt.s32.totalorder %s14, 2
    // Predicated region
    $region37: #{mlp_forward.1} parent=5 // pred_check
      %p226 = pneg %p225
    $region38: #{mlp_forward.1} parent=5 // pred_check_branch
      %228 = sbr.rel (%p226) target = $region40
    $region39: #{mlp_forward.1} parent=5 // pred_region
      // Predicated region
      $region41: #{mlp_forward.1} parent=39 // pred_check
        %p229 = pneg %p34
      $region42: #{mlp_forward.1} parent=39 // pred_check_branch
        %231 = sbr.rel (%p229) target = $region44
      $region43: #{mlp_forward.1} parent=39 // pred_region
        %s232 = smul.u32 16, %s14
        %p233 = scmp.lt.s32.totalorder %s232, 31
        %s234 = scalar_select %p233, %s232, 31
        %s235 = smul.addr %s234, 8
        %s236 = scalar_lea.vmem %s0, %s235
        %s237 = smul.u32 16, %s14
      $region44: #{mlp_forward.1} parent=39 // pred_fallthru
        _
    $region40: #{mlp_forward.1} parent=5 // pred_fallthru
      _
    %p238 = scmp.le.s32.totalorder 1, %s14
    %p239 = scmp.lt.s32.totalorder %s14, 3
    %p240 = pnand %p238, %p239
    %p241 = pneg %p240
    // Predicated region
    $region45: #{mlp_forward.1} parent=5 // pred_check
      _
    $region46: #{mlp_forward.1} parent=5 // pred_check_branch
      %243 = sbr.rel (%p240) target = $region48
    $region47: #{mlp_forward.1} parent=5 // pred_region
      %s244 = ssub.s32 %s14, 1
      %s245 = smul.u32 16, %s19
      %p246 = scmp.lt.s32.totalorder %s245, 31
      %s247 = scalar_select %p246, %s245, 31
      %s248 = smul.addr %s247, 8
      %s249 = scalar_lea.vmem %s0, %s248
      %p250 = pneg %p40
      %p251 = pneg %p37
      %p252 = pneg %p61
      %p253 = pneg %p58
      %p254 = pneg %p82
      %p255 = pneg %p79
      %p256 = pneg %p103
      %p257 = pneg %p100
      %p258 = pneg %p124
      %p259 = pneg %p121
      %p260 = pneg %p145
      %p261 = pneg %p142
      %p262 = pneg %p166
      %p263 = pneg %p163
      %p264 = pneg %p192
      %p265 = pneg %p189
      %s266 = smul.u32 16, %s19
      %p267 = scmp.lt.s32.totalorder %s266, 31
      %s268 = scalar_select %p267, %s266, 31
      %s269 = smul.addr %s268, 8
      %s270 = scalar_lea.vmem %s7, %s269
      %s271 = smul.u32 16, %s19
      %p272 = scmp.lt.s32.totalorder %s271, 31
      %s273 = scalar_select %p272, %s271, 31
      %s274 = smul.addr %s273, 8
      %s275 = scalar_lea.vmem %s0, %s274
      %s276 = smul.u32 16, %s19
      %s277 = smul.u32 16, %s19
      %p278 = scmp.lt.s32.totalorder %s277, 31
      %s279 = scalar_select %p278, %s277, 31
      %s280 = smul.addr %s279, 8
      %s281 = scalar_lea.vmem %s7, %s280
      %s282 = smul.u32 16, %s19
      %v283 = vld [vmem:[%s275] sm:$0xff]
      %v284 = vld [vmem:[%s275 + $0x8] sm:$0xff]
      %v285 = vld [vmem:[%s275 + $0x10] sm:$0xff]
      %v286 = vld [vmem:[%s275 + $0x18] sm:$0xff]
      %v287 = vld [vmem:[%s275 + $0x20] sm:$0xff]
      %v288 = vld [vmem:[%s275 + $0x28] sm:$0xff]
      %v289 = vld [vmem:[%s275 + $0x30] sm:$0xff]
      %v290 = vld [vmem:[%s275 + $0x38] sm:$0xff]
      %v291 = vld [vmem:[%s275 + $0x40] sm:$0xff]
      %v292 = vld [vmem:[%s275 + $0x48] sm:$0xff]
      %v293 = vld [vmem:[%s275 + $0x50] sm:$0xff]
      %v294 = vld [vmem:[%s275 + $0x58] sm:$0xff]
      %v295 = vld [vmem:[%s275 + $0x60] sm:$0xff]
      %v296 = vld [vmem:[%s275 + $0x68] sm:$0xff]
      %v297 = vld [vmem:[%s275 + $0x70] sm:$0xff]
      %v298 = vld [vmem:[%s275 + $0x78] sm:$0xff]
      %v299 = vld [vmem:[%s1] sm:$0xff]
      %v300 = vld [vmem:[%s1 + $0x8] sm:$0xff]
      %v301 = vld [vmem:[%s2] sm:$0x1]
      %v303 = vperm.slane %v301, 0
      %vm305 = vcmask 130048
      %v307 = vsel %vm305, %v283, 0
      %v310 = vsel %vm305, %v284, 0
      %v313 = vsel %vm305, %v285, 0
      %v316 = vsel %vm305, %v286, 0
      %v319 = vsel %vm305, %v287, 0
      %v322 = vsel %vm305, %v288, 0
      %v325 = vsel %vm305, %v289, 0
      %v328 = vsel %vm305, %v290, 0
      %v331 = vsel %vm305, %v291, 0
      %v334 = vsel %vm305, %v292, 0
      %v337 = vsel %vm305, %v293, 0
      %v340 = vsel %vm305, %v294, 0
      %v343 = vsel %vm305, %v295, 0
      %v346 = vsel %vm305, %v296, 0
      %v349 = vsel %vm305, %v297, 0
      %v352 = vsel %vm305, %v298, 0
      %354 = vmatpush.msra.mxu0 0.0
      %355 = vmatpush.msra.mxu0 0.0
      %356 = vmatpush.msra.mxu0 0.0
      %357 = vmatpush.msra.mxu0 0.0
      %358 = vmatpush.msra.mxu0 0.0
      %359 = vmatpush.msra.mxu0 0.0
      %360 = vmatpush.msra.mxu0 0.0
      %361 = vmatpush.msra.mxu0 0.0
      %362 = vmatpush.msra.mxu0 0.0
      %363 = vmatpush.msra.mxu0 0.0
      %364 = vmatpush.msra.mxu0 0.0
      %365 = vmatpush.msra.mxu0 0.0
      %366 = vmatpush.msra.mxu0 0.0
      %367 = vmatpush.msra.mxu0 0.0
      %368 = vmatpush.msra.mxu0 %v300
      %369 = vmatpush.msra.mxu0 %v299
      %370 = vmatmul.f32.gmra.mxu0 %v307
      %v371 = vpop.f32.mrf.mxu0
      %v372 = vadd.f32 %v303, %v371
      %373 = vmatmul.f32.gmra.mxu0 %v310
      %v374 = vpop.f32.mrf.mxu0
      %v375 = vadd.f32 %v303, %v374
      %376 = vmatmul.f32.gmra.mxu0 %v313
      %v377 = vpop.f32.mrf.mxu0
      %v378 = vadd.f32 %v303, %v377
      %379 = vmatmul.f32.gmra.mxu0 %v316
      %v380 = vpop.f32.mrf.mxu0
      %v381 = vadd.f32 %v303, %v380
      %382 = vmatmul.f32.gmra.mxu0 %v319
      %v383 = vpop.f32.mrf.mxu0
      %v384 = vadd.f32 %v303, %v383
      %385 = vmatmul.f32.gmra.mxu0 %v322
      %v386 = vpop.f32.mrf.mxu0
      %v387 = vadd.f32 %v303, %v386
      %388 = vmatmul.f32.gmra.mxu0 %v325
      %v389 = vpop.f32.mrf.mxu0
      %v390 = vadd.f32 %v303, %v389
      %391 = vmatmul.f32.gmra.mxu0 %v328
      %v392 = vpop.f32.mrf.mxu0
      %v393 = vadd.f32 %v303, %v392
      %394 = vmatmul.f32.gmra.mxu0 %v331
      %v395 = vpop.f32.mrf.mxu0
      %v396 = vadd.f32 %v303, %v395
      %397 = vmatmul.f32.gmra.mxu0 %v334
      %v398 = vpop.f32.mrf.mxu0
      %v399 = vadd.f32 %v303, %v398
      %400 = vmatmul.f32.gmra.mxu0 %v337
      %v401 = vpop.f32.mrf.mxu0
      %v402 = vadd.f32 %v303, %v401
      %403 = vmatmul.f32.gmra.mxu0 %v340
      %v404 = vpop.f32.mrf.mxu0
      %v405 = vadd.f32 %v303, %v404
      %406 = vmatmul.f32.gmra.mxu0 %v343
      %v407 = vpop.f32.mrf.mxu0
      %v408 = vadd.f32 %v303, %v407
      %409 = vmatmul.f32.gmra.mxu0 %v346
      %v410 = vpop.f32.mrf.mxu0
      %v411 = vadd.f32 %v303, %v410
      %412 = vmatmul.f32.gmra.mxu0 %v349
      %v413 = vpop.f32.mrf.mxu0
      %v414 = vadd.f32 %v303, %v413
      %415 = vmatmul.f32.gmra.mxu0 %v352
      %v416 = vpop.f32.mrf.mxu0
      %v417 = vadd.f32 %v303, %v416
      %418 = vdwg.mxu0
      %vm419 = vcmp.gt.f32.partialorder %v372, 0.0
      %vm420 = vcmp.gt.f32.partialorder %v375, 0.0
      %vm421 = vcmp.gt.f32.partialorder %v378, 0.0
      %vm422 = vcmp.gt.f32.partialorder %v381, 0.0
      %vm423 = vcmp.gt.f32.partialorder %v384, 0.0
      %vm424 = vcmp.gt.f32.partialorder %v387, 0.0
      %vm425 = vcmp.gt.f32.partialorder %v390, 0.0
      %vm426 = vcmp.gt.f32.partialorder %v393, 0.0
      %vm427 = vcmp.gt.f32.partialorder %v396, 0.0
      %vm428 = vcmp.gt.f32.partialorder %v399, 0.0
      %vm429 = vcmp.gt.f32.partialorder %v402, 0.0
      %vm430 = vcmp.gt.f32.partialorder %v405, 0.0
      %vm431 = vcmp.gt.f32.partialorder %v408, 0.0
      %vm432 = vcmp.gt.f32.partialorder %v411, 0.0
      %vm433 = vcmp.gt.f32.partialorder %v414, 0.0
      %vm434 = vcmp.gt.f32.partialorder %v417, 0.0
      %v435 = vmin.f32 %v372, 0.0
      %v436 = vmin.f32 %v375, 0.0
      %v437 = vmin.f32 %v378, 0.0
      %v438 = vmin.f32 %v381, 0.0
      %v439 = vmin.f32 %v384, 0.0
      %v440 = vmin.f32 %v387, 0.0
      %v441 = vmin.f32 %v390, 0.0
      %v442 = vmin.f32 %v393, 0.0
      %v443 = vmin.f32 %v396, 0.0
      %v444 = vmin.f32 %v399, 0.0
      %v445 = vmin.f32 %v402, 0.0
      %v446 = vmin.f32 %v405, 0.0
      %v447 = vmin.f32 %v408, 0.0
      %v448 = vmin.f32 %v411, 0.0
      %v449 = vmin.f32 %v414, 0.0
      %v450 = vmin.f32 %v417, 0.0
      %v451 = vmul.f32 %v435, 1.442695
      %v452 = vpow.pop %v451
      %v453 = vmul.f32 %v436, 1.442695
      %v454 = vpow.pop %v453
      %v455 = vmul.f32 %v437, 1.442695
      %v456 = vpow.pop %v455
      %v457 = vmul.f32 %v438, 1.442695
      %v458 = vpow.pop %v457
      %v459 = vmul.f32 %v439, 1.442695
      %v460 = vpow.pop %v459
      %v461 = vmul.f32 %v440, 1.442695
      %v462 = vpow.pop %v461
      %v463 = vmul.f32 %v441, 1.442695
      %v464 = vpow.pop %v463
      %v465 = vmul.f32 %v442, 1.442695
      %v466 = vpow.pop %v465
      %v467 = vmul.f32 %v443, 1.442695
      %v468 = vpow.pop %v467
      %v469 = vmul.f32 %v444, 1.442695
      %v470 = vpow.pop %v469
      %v471 = vmul.f32 %v445, 1.442695
      %v472 = vpow.pop %v471
      %v473 = vmul.f32 %v446, 1.442695
      %v474 = vpow.pop %v473
      %v475 = vmul.f32 %v447, 1.442695
      %v476 = vpow.pop %v475
      %v477 = vmul.f32 %v448, 1.442695
      %v478 = vpow.pop %v477
      %v479 = vmul.f32 %v449, 1.442695
      %v480 = vpow.pop %v479
      %v481 = vmul.f32 %v450, 1.442695
      %v482 = vpow.pop %v481
      %v483 = vsub.f32 %v452, 1.0
      %v484 = vsub.f32 %v454, 1.0
      %v485 = vsub.f32 %v456, 1.0
      %v486 = vsub.f32 %v458, 1.0
      %v487 = vsub.f32 %v460, 1.0
      %v488 = vsub.f32 %v462, 1.0
      %v489 = vsub.f32 %v464, 1.0
      %v490 = vsub.f32 %v466, 1.0
      %v491 = vsub.f32 %v468, 1.0
      %v492 = vsub.f32 %v470, 1.0
      %v493 = vsub.f32 %v472, 1.0
      %v494 = vsub.f32 %v474, 1.0
      %v495 = vsub.f32 %v476, 1.0
      %v496 = vsub.f32 %v478, 1.0
      %v497 = vsub.f32 %v480, 1.0
      %v498 = vsub.f32 %v482, 1.0
      %v499 = vsel %vm419, %v372, %v483
      %v500 = vsel %vm420, %v375, %v484
      %v501 = vsel %vm421, %v378, %v485
      %v502 = vsel %vm422, %v381, %v486
      %v503 = vsel %vm423, %v384, %v487
      %v504 = vsel %vm424, %v387, %v488
      %v505 = vsel %vm425, %v390, %v489
      %v506 = vsel %vm426, %v393, %v490
      %v507 = vsel %vm427, %v396, %v491
      %v508 = vsel %vm428, %v399, %v492
      %v509 = vsel %vm429, %v402, %v493
      %v510 = vsel %vm430, %v405, %v494
      %v511 = vsel %vm431, %v408, %v495
      %v512 = vsel %vm432, %v411, %v496
      %v513 = vsel %vm433, %v414, %v497
      %v514 = vsel %vm434, %v417, %v498
      %v515 = vld [vmem:[%s3] sm:$0xff]
      %v516 = vld [vmem:[%s3 + $0x8] sm:$0xff]
      %v517 = vld [vmem:[%s3 + $0x10] sm:$0xff]
      %v518 = vld [vmem:[%s3 + $0x18] sm:$0xff]
      %v519 = vld [vmem:[%s3 + $0x20] sm:$0xff]
      %v520 = vld [vmem:[%s3 + $0x28] sm:$0xff]
      %v521 = vld [vmem:[%s3 + $0x30] sm:$0xff]
      %v522 = vld [vmem:[%s3 + $0x38] sm:$0xff]
      %v523 = vld [vmem:[%s3 + $0x40] sm:$0xff]
      %v524 = vld [vmem:[%s3 + $0x48] sm:$0xff]
      %v525 = vld [vmem:[%s3 + $0x50] sm:$0xff]
      %v526 = vld [vmem:[%s3 + $0x58] sm:$0xff]
      %v527 = vld [vmem:[%s3 + $0x60] sm:$0xff]
      %v528 = vld [vmem:[%s3 + $0x68] sm:$0xff]
      %v529 = vld [vmem:[%s3 + $0x70] sm:$0xff]
      %v530 = vld [vmem:[%s3 + $0x78] sm:$0xff]
      %v531 = vld [vmem:[%s4] sm:$0x1]
      %v533 = vperm.slane %v531, 0
      %535 = vmatpush.msra.mxu0 %v530
      %536 = vmatpush.msra.mxu0 %v529
      %537 = vmatpush.msra.mxu0 %v528
      %538 = vmatpush.msra.mxu0 %v527
      %539 = vmatpush.msra.mxu0 %v526
      %540 = vmatpush.msra.mxu0 %v525
      %541 = vmatpush.msra.mxu0 %v524
      %542 = vmatpush.msra.mxu0 %v523
      %543 = vmatpush.msra.mxu0 %v522
      %544 = vmatpush.msra.mxu0 %v521
      %545 = vmatpush.msra.mxu0 %v520
      %546 = vmatpush.msra.mxu0 %v519
      %547 = vmatpush.msra.mxu0 %v518
      %548 = vmatpush.msra.mxu0 %v517
      %549 = vmatpush.msra.mxu0 %v516
      %550 = vmatpush.msra.mxu0 %v515
      %551 = vmatmul.f32.gmra.mxu0 %v499
      %v552 = vpop.f32.mrf.mxu0
      %v553 = vadd.f32 %v533, %v552
      %554 = vmatmul.f32.gmra.mxu0 %v500
      %v555 = vpop.f32.mrf.mxu0
      %v556 = vadd.f32 %v533, %v555
      %557 = vmatmul.f32.gmra.mxu0 %v501
      %v558 = vpop.f32.mrf.mxu0
      %v559 = vadd.f32 %v533, %v558
      %560 = vmatmul.f32.gmra.mxu0 %v502
      %v561 = vpop.f32.mrf.mxu0
      %v562 = vadd.f32 %v533, %v561
      %563 = vmatmul.f32.gmra.mxu0 %v503
      %v564 = vpop.f32.mrf.mxu0
      %v565 = vadd.f32 %v533, %v564
      %566 = vmatmul.f32.gmra.mxu0 %v504
      %v567 = vpop.f32.mrf.mxu0
      %v568 = vadd.f32 %v533, %v567
      %569 = vmatmul.f32.gmra.mxu0 %v505
      %v570 = vpop.f32.mrf.mxu0
      %v571 = vadd.f32 %v533, %v570
      %572 = vmatmul.f32.gmra.mxu0 %v506
      %v573 = vpop.f32.mrf.mxu0
      %v574 = vadd.f32 %v533, %v573
      %575 = vmatmul.f32.gmra.mxu0 %v507
      %v576 = vpop.f32.mrf.mxu0
      %v577 = vadd.f32 %v533, %v576
      %578 = vmatmul.f32.gmra.mxu0 %v508
      %v579 = vpop.f32.mrf.mxu0
      %v580 = vadd.f32 %v533, %v579
      %581 = vmatmul.f32.gmra.mxu0 %v509
      %v582 = vpop.f32.mrf.mxu0
      %v583 = vadd.f32 %v533, %v582
      %584 = vmatmul.f32.gmra.mxu0 %v510
      %v585 = vpop.f32.mrf.mxu0
      %v586 = vadd.f32 %v533, %v585
      %587 = vmatmul.f32.gmra.mxu0 %v511
      %v588 = vpop.f32.mrf.mxu0
      %v589 = vadd.f32 %v533, %v588
      %590 = vmatmul.f32.gmra.mxu0 %v512
      %v591 = vpop.f32.mrf.mxu0
      %v592 = vadd.f32 %v533, %v591
      %593 = vmatmul.f32.gmra.mxu0 %v513
      %v594 = vpop.f32.mrf.mxu0
      %v595 = vadd.f32 %v533, %v594
      %596 = vmatmul.f32.gmra.mxu0 %v514
      %v597 = vpop.f32.mrf.mxu0
      %v598 = vadd.f32 %v533, %v597
      %599 = vdwg.mxu0
      %vm600 = vcmp.gt.f32.partialorder %v553, 0.0
      %vm601 = vcmp.gt.f32.partialorder %v556, 0.0
      %vm602 = vcmp.gt.f32.partialorder %v559, 0.0
      %vm603 = vcmp.gt.f32.partialorder %v562, 0.0
      %vm604 = vcmp.gt.f32.partialorder %v565, 0.0
      %vm605 = vcmp.gt.f32.partialorder %v568, 0.0
      %vm606 = vcmp.gt.f32.partialorder %v571, 0.0
      %vm607 = vcmp.gt.f32.partialorder %v574, 0.0
      %vm608 = vcmp.gt.f32.partialorder %v577, 0.0
      %vm609 = vcmp.gt.f32.partialorder %v580, 0.0
      %vm610 = vcmp.gt.f32.partialorder %v583, 0.0
      %vm611 = vcmp.gt.f32.partialorder %v586, 0.0
      %vm612 = vcmp.gt.f32.partialorder %v589, 0.0
      %vm613 = vcmp.gt.f32.partialorder %v592, 0.0
      %vm614 = vcmp.gt.f32.partialorder %v595, 0.0
      %vm615 = vcmp.gt.f32.partialorder %v598, 0.0
      %v616 = vmin.f32 %v553, 0.0
      %v617 = vmin.f32 %v556, 0.0
      %v618 = vmin.f32 %v559, 0.0
      %v619 = vmin.f32 %v562, 0.0
      %v620 = vmin.f32 %v565, 0.0
      %v621 = vmin.f32 %v568, 0.0
      %v622 = vmin.f32 %v571, 0.0
      %v623 = vmin.f32 %v574, 0.0
      %v624 = vmin.f32 %v577, 0.0
      %v625 = vmin.f32 %v580, 0.0
      %v626 = vmin.f32 %v583, 0.0
      %v627 = vmin.f32 %v586, 0.0
      %v628 = vmin.f32 %v589, 0.0
      %v629 = vmin.f32 %v592, 0.0
      %v630 = vmin.f32 %v595, 0.0
      %v631 = vmin.f32 %v598, 0.0
      %v632 = vmul.f32 %v616, 1.442695
      %v633 = vpow.pop %v632
      %v634 = vmul.f32 %v617, 1.442695
      %v635 = vpow.pop %v634
      %v636 = vmul.f32 %v618, 1.442695
      %v637 = vpow.pop %v636
      %v638 = vmul.f32 %v619, 1.442695
      %v639 = vpow.pop %v638
      %v640 = vmul.f32 %v620, 1.442695
      %v641 = vpow.pop %v640
      %v642 = vmul.f32 %v621, 1.442695
      %v643 = vpow.pop %v642
      %v644 = vmul.f32 %v622, 1.442695
      %v645 = vpow.pop %v644
      %v646 = vmul.f32 %v623, 1.442695
      %v647 = vpow.pop %v646
      %v648 = vmul.f32 %v624, 1.442695
      %v649 = vpow.pop %v648
      %v650 = vmul.f32 %v625, 1.442695
      %v651 = vpow.pop %v650
      %v652 = vmul.f32 %v626, 1.442695
      %v653 = vpow.pop %v652
      %v654 = vmul.f32 %v627, 1.442695
      %v655 = vpow.pop %v654
      %v656 = vmul.f32 %v628, 1.442695
      %v657 = vpow.pop %v656
      %v658 = vmul.f32 %v629, 1.442695
      %v659 = vpow.pop %v658
      %v660 = vmul.f32 %v630, 1.442695
      %v661 = vpow.pop %v660
      %v662 = vmul.f32 %v631, 1.442695
      %v663 = vpow.pop %v662
      %v664 = vsub.f32 %v633, 1.0
      %v665 = vsub.f32 %v635, 1.0
      %v666 = vsub.f32 %v637, 1.0
      %v667 = vsub.f32 %v639, 1.0
      %v668 = vsub.f32 %v641, 1.0
      %v669 = vsub.f32 %v643, 1.0
      %v670 = vsub.f32 %v645, 1.0
      %v671 = vsub.f32 %v647, 1.0
      %v672 = vsub.f32 %v649, 1.0
      %v673 = vsub.f32 %v651, 1.0
      %v674 = vsub.f32 %v653, 1.0
      %v675 = vsub.f32 %v655, 1.0
      %v676 = vsub.f32 %v657, 1.0
      %v677 = vsub.f32 %v659, 1.0
      %v678 = vsub.f32 %v661, 1.0
      %v679 = vsub.f32 %v663, 1.0
      %v680 = vsel %vm600, %v553, %v664
      %v681 = vsel %vm601, %v556, %v665
      %v682 = vsel %vm602, %v559, %v666
      %v683 = vsel %vm603, %v562, %v667
      %v684 = vsel %vm604, %v565, %v668
      %v685 = vsel %vm605, %v568, %v669
      %v686 = vsel %vm606, %v571, %v670
      %v687 = vsel %vm607, %v574, %v671
      %v688 = vsel %vm608, %v577, %v672
      %v689 = vsel %vm609, %v580, %v673
      %v690 = vsel %vm610, %v583, %v674
      %v691 = vsel %vm611, %v586, %v675
      %v692 = vsel %vm612, %v589, %v676
      %v693 = vsel %vm613, %v592, %v677
      %v694 = vsel %vm614, %v595, %v678
      %v695 = vsel %vm615, %v598, %v679
      %v696 = vld [vmem:[%s5] sm:$0x1]
      %v698 = vperm.slane %v696, 0
      %v700 = vmul.f32 %v680, %v698
      %v701 = vmul.f32 %v681, %v698
      %v702 = vmul.f32 %v682, %v698
      %v703 = vmul.f32 %v683, %v698
      %v704 = vmul.f32 %v684, %v698
      %v705 = vmul.f32 %v685, %v698
      %v706 = vmul.f32 %v686, %v698
      %v707 = vmul.f32 %v687, %v698
      %v708 = vmul.f32 %v688, %v698
      %v709 = vmul.f32 %v689, %v698
      %v710 = vmul.f32 %v690, %v698
      %v711 = vmul.f32 %v691, %v698
      %v712 = vmul.f32 %v692, %v698
      %v713 = vmul.f32 %v693, %v698
      %v714 = vmul.f32 %v694, %v698
      %v715 = vmul.f32 %v695, %v698
      %716 = vadd.xlane.f32.xlu0 %v700
      %v717 = vpop.xlane.xlu0 %716
      %718 = vadd.xlane.f32.xlu0 %v701
      %v719 = vpop.xlane.xlu0 %718
      %720 = vadd.xlane.f32.xlu0 %v702
      %v721 = vpop.xlane.xlu0 %720
      %722 = vadd.xlane.f32.xlu0 %v703
      %v723 = vpop.xlane.xlu0 %722
      %724 = vadd.xlane.f32.xlu0 %v704
      %v725 = vpop.xlane.xlu0 %724
      %726 = vadd.xlane.f32.xlu0 %v705
      %v727 = vpop.xlane.xlu0 %726
      %728 = vadd.xlane.f32.xlu0 %v706
      %v729 = vpop.xlane.xlu0 %728
      %730 = vadd.xlane.f32.xlu0 %v707
      %v731 = vpop.xlane.xlu0 %730
      %732 = vadd.xlane.f32.xlu0 %v708
      %v733 = vpop.xlane.xlu0 %732
      %734 = vadd.xlane.f32.xlu0 %v709
      %v735 = vpop.xlane.xlu0 %734
      %736 = vadd.xlane.f32.xlu0 %v710
      %v737 = vpop.xlane.xlu0 %736
      %738 = vadd.xlane.f32.xlu0 %v711
      %v739 = vpop.xlane.xlu0 %738
      %740 = vadd.xlane.f32.xlu0 %v712
      %v741 = vpop.xlane.xlu0 %740
      %742 = vadd.xlane.f32.xlu0 %v713
      %v743 = vpop.xlane.xlu0 %742
      %744 = vadd.xlane.f32.xlu0 %v714
      %v745 = vpop.xlane.xlu0 %744
      %746 = vadd.xlane.f32.xlu0 %v715
      %v747 = vpop.xlane.xlu0 %746
      %s748 = sld [smem:[#allocation2]]
      %v749 = vstv %s748
      %v750 = vadd.f32 %v717, %v749
      %v751 = vadd.f32 %v719, %v749
      %v752 = vadd.f32 %v721, %v749
      %v753 = vadd.f32 %v723, %v749
      %v754 = vadd.f32 %v725, %v749
      %v755 = vadd.f32 %v727, %v749
      %v756 = vadd.f32 %v729, %v749
      %v757 = vadd.f32 %v731, %v749
      %v758 = vadd.f32 %v733, %v749
      %v759 = vadd.f32 %v735, %v749
      %v760 = vadd.f32 %v737, %v749
      %v761 = vadd.f32 %v739, %v749
      %v762 = vadd.f32 %v741, %v749
      %v763 = vadd.f32 %v743, %v749
      %v764 = vadd.f32 %v745, %v749
      %v765 = vadd.f32 %v747, %v749
      %766 = vst [vmem:[%s281] sm:$0xff] %v750
      %767 = vst [vmem:[%s281 + $0x8] sm:$0xff] %v751
      %768 = vst [vmem:[%s281 + $0x10] sm:$0xff] %v752
      %769 = vst [vmem:[%s281 + $0x18] sm:$0xff] %v753
      %770 = vst [vmem:[%s281 + $0x20] sm:$0xff] %v754
      %771 = vst [vmem:[%s281 + $0x28] sm:$0xff] %v755
      %772 = vst [vmem:[%s281 + $0x30] sm:$0xff] %v756
      %773 = vst [vmem:[%s281 + $0x38] sm:$0xff] %v757
      %774 = vst [vmem:[%s281 + $0x40] sm:$0xff] %v758
      %775 = vst [vmem:[%s281 + $0x48] sm:$0xff] %v759
      %776 = vst [vmem:[%s281 + $0x50] sm:$0xff] %v760
      %777 = vst [vmem:[%s281 + $0x58] sm:$0xff] %v761
      %778 = vst [vmem:[%s281 + $0x60] sm:$0xff] %v762
      %779 = vst [vmem:[%s281 + $0x68] sm:$0xff] %v763
      %780 = vst [vmem:[%s281 + $0x70] sm:$0xff] %v764
      %781 = vst [vmem:[%s281 + $0x78] sm:$0xff] %v765
      %s782 = smul.u32 16, %s19
      %p783 = scmp.lt.s32.totalorder %s782, 31
      %s784 = scalar_select %p783, %s782, 31
      %s785 = smul.addr %s784, 8
      %s786 = scalar_lea.vmem %s7, %s785
      // Predicated region
      $region49: #{mlp_forward.1} parent=47 // pred_check
        %p787 = pneg %p189
      $region50: #{mlp_forward.1} parent=47 // pred_check_branch
        %789 = sbr.rel (%p787) target = $region52
      $region51: #{mlp_forward.1} parent=47 // pred_region
        %s790 = smul.u32 16, %s19
      $region52: #{mlp_forward.1} parent=47 // pred_fallthru
        _
    $region48: #{mlp_forward.1} parent=5 // pred_fallthru
      _
    %p791 = scmp.le.s32.totalorder 2, %s14
    // Predicated region
    $region53: #{mlp_forward.1} parent=5 // pred_check
      %p792 = pneg %p791
    $region54: #{mlp_forward.1} parent=5 // pred_check_branch
      %794 = sbr.rel (%p792) target = $region56
    $region55: #{mlp_forward.1} parent=5 // pred_region
      %s795 = ssub.s32 %s14, 2
      // Predicated region
      $region57: #{mlp_forward.1} parent=55 // pred_check
        %p796 = pneg %p195
      $region58: #{mlp_forward.1} parent=55 // pred_check_branch
        %798 = sbr.rel (%p796) target = $region60
      $region59: #{mlp_forward.1} parent=55 // pred_region
        %s799 = smul.u32 16, %s20
        %p800 = scmp.lt.s32.totalorder %s799, 31
        %s801 = scalar_select %p800, %s799, 31
        %s802 = smul.addr %s801, 8
        %s803 = scalar_lea.vmem %s7, %s802
      $region60: #{mlp_forward.1} parent=55 // pred_fallthru
        _
    $region56: #{mlp_forward.1} parent=5 // pred_fallthru
      _
  $region6: #{mlp_forward.1} parent=0 // loop_footer
    %s18 = sadd.s32 1, %s14
  $region7: #{mlp_forward.1} parent=0 // loop_footer_branch
    %13 = sbr.rel target = $region3
  $region8: #{mlp_forward.1} parent=0 // loop_exit
    _

</llo_original>
